<compile_context>
chip_gen: v6e
topology: v6e:2x2x1
jax: 0.10.0
libtpu: 0.0.40
codegen_flags: <defaults>
</compile_context>

<pallas_src>
import jax
import jax.numpy as jnp
from jax.experimental import pallas as pl
from jax.experimental.pallas import tpu as pltpu


HIDDEN = 256
VMEM_LIMIT_BYTES = 32 * 1024 * 1024   # explicit: > v5e's 16 MiB default scoped limit


def _round_up(x, m):
    return ((x + m - 1) // m) * m


# ----------------------------------------------------------------------------
# Kernel
# ----------------------------------------------------------------------------
def actor_kernel(obs_ref,
                 w0_ref, b0_ref,
                 w1_ref, b1_ref,
                 w2_ref, b2_ref,
                 w3_ref, b3_ref,
                 w4_ref, b4_ref,
                 ah_ref,
                 out_ref):
    # Hidden layers: bf16 MXU inputs, f32 accumulation, packed-bf16 bias + ReLU.
    x = obs_ref[...].astype(jnp.bfloat16)                         # (TM, obs_dim)
    for w_ref, b_ref in ((w0_ref, b0_ref), (w1_ref, b1_ref),
                         (w2_ref, b2_ref), (w3_ref, b3_ref)):
        y = jnp.dot(x, w_ref[...], preferred_element_type=jnp.float32)
        # bf16 bias-add + ReLU (2 elems/lane on the VPU); result feeds next MXU.
        x = jnp.maximum(y.astype(jnp.bfloat16) + b_ref[...], 0.0)

    # Output head in f32 on a tiny (TM, action_dim) tile: full precision actions.
    y = jnp.dot(x, w4_ref[...], preferred_element_type=jnp.float32) + b4_ref[...]
    out_ref[...] = jnp.tanh(y) * ah_ref[...]                      # (TM, action_dim)


# ----------------------------------------------------------------------------
# One-time parameter preparation (bf16 cast, amortized over many calls)
# ----------------------------------------------------------------------------
def prepare_params(params, action_high):
    """Cast weights (and hidden-layer biases) to bf16. Returns a flat tuple."""
    def w(i):
        return params[f"w{i}"].astype(jnp.bfloat16)

    def b16(i):
        return params[f"b{i}"].astype(jnp.bfloat16).reshape(1, -1)

    b4 = params["b4"].astype(jnp.float32).reshape(1, -1)
    ah = jnp.asarray(action_high, jnp.float32).reshape(1, -1)

    return (w(0), b16(0), w(1), b16(1), w(2), b16(2), w(3), b16(3), w(4), b4, ah)


# ----------------------------------------------------------------------------
# Tile selection
# ----------------------------------------------------------------------------
def _pick_tm(batch, tm_max=1024):
    """Batch tile size.

    Small/medium batch -> one tile covering the whole batch (block == full dim,
    no wrapper padding needed).  Larger batches -> >= 2 tiles (so v7x's two
    TensorCores both get work via the parallel grid axis), each a sublane
    multiple, capped at tm_max to amortize per-grid-step overhead.
    """
    if batch <= 256:
        return batch
    return min(tm_max, _round_up((batch + 1) // 2, 8))


# ----------------------------------------------------------------------------
# Forward wrapper
# ----------------------------------------------------------------------------
def actor_forward(obs, prepared, *, tm_max=1024):
    """obs: [B, obs_dim].  prepared: output of prepare_params."""
    if obs.dtype != jnp.float32:
        obs = obs.astype(jnp.float32)
    B, obs_dim = obs.shape
    action_dim = prepared[-1].shape[-1]

    TM = _pick_tm(B, tm_max)
    num_tiles = pl.cdiv(B, TM)   # partial last tile handled by Pallas edge masking

    # Batch-tiled obs/out; weights/biases use a constant index_map so they stay
    # VMEM-resident (DMA'd once) across batch tiles.
    in_specs = [pl.BlockSpec((TM, obs_dim), lambda i: (i, 0))]
    in_specs += [pl.BlockSpec(p.shape, lambda i: (0, 0)) for p in prepared]
    out_spec = pl.BlockSpec((TM, action_dim), lambda i: (i, 0))

    # Cost estimate on REAL (unpadded) dims — scheduling hint only.
    flops = 2 * B * (obs_dim * HIDDEN + 3 * HIDDEN * HIDDEN + HIDDEN * action_dim)
    weight_bytes = sum(int(p.size) * p.dtype.itemsize for p in prepared)
    bytes_accessed = (obs.size * obs.dtype.itemsize
                      + B * action_dim * 4
                      + weight_bytes)
    cost = pl.CostEstimate(flops=flops,
                           transcendentals=B * action_dim,
                           bytes_accessed=bytes_accessed)

    return pl.pallas_call(
        actor_kernel,
        out_shape=jax.ShapeDtypeStruct((B, action_dim), jnp.float32),
        grid_spec=pltpu.PrefetchScalarGridSpec(
            num_scalar_prefetch=0,
            grid=(num_tiles,),
            in_specs=in_specs,
            out_specs=out_spec,
        ),
        compiler_params=pltpu.CompilerParams(
            dimension_semantics=("parallel",),      # shards batch tiles across TCs
            vmem_limit_bytes=VMEM_LIMIT_BYTES,      # headroom on v5e's 16 MiB default
        ),
        cost_estimate=cost,
    )(obs, *prepared)


# ----------------------------------------------------------------------------
# Init + reference
# ----------------------------------------------------------------------------
def init_params(key, obs_dim, action_dim):
    """Deterministic init mimicking PyTorch nn.Linear (uniform +-1/sqrt(fan_in)).

    Weights are stored [in_features, out_features] (transposed vs. PyTorch)."""
    dims = [(obs_dim, HIDDEN), (HIDDEN, HIDDEN), (HIDDEN, HIDDEN),
            (HIDDEN, HIDDEN), (HIDDEN, action_dim)]
    params = {}
    for i, (fan_in, fan_out) in enumerate(dims):
        key, kw, kb = jax.random.split(key, 3)
        bound = 1.0 / jnp.sqrt(fan_in)
        params[f"w{i}"] = jax.random.uniform(
            kw, (fan_in, fan_out), jnp.float32, -bound, bound)
        params[f"b{i}"] = jax.random.uniform(
            kb, (fan_out,), jnp.float32, -bound, bound)
    return params


def reference_forward(obs, params, action_high):
    x = obs
    for i in range(4):
        x = jnp.maximum(x @ params[f"w{i}"] + params[f"b{i}"], 0.0)
    return jnp.tanh(x @ params["w4"] + params["b4"]) * action_high


# ----------------------------------------------------------------------------
if __name__ == "__main__":
    key = jax.random.PRNGKey(0)
    B, obs_dim, action_dim = 2, 16, 4

    k_obs, k_params, k_big = jax.random.split(key, 3)
    obs = jax.random.normal(k_obs, (B, obs_dim), jnp.float32)
    params = init_params(k_params, obs_dim, action_dim)
    action_high = jnp.ones((action_dim,), jnp.float32)  # robot reach action bounds

    prepared = prepare_params(params, action_high)

    # Small-batch check (single tile, block == full batch, no wrapper pad/slice).
    out = actor_forward(obs, prepared)
    out = jax.block_until_ready(out)
    ref = reference_forward(obs, params, action_high)
    assert out.shape == (B, action_dim)
    # bf16 weights/biases/activations -> loose tolerance vs the pure-f32 reference.
    assert jnp.allclose(out, ref, atol=3e-2, rtol=3e-2), "mismatch vs reference (small batch)"

    # Larger-batch check: >= 2 grid tiles with a partial (masked) last tile.
    B2 = 260
    obs2 = jax.random.normal(k_big, (B2, obs_dim), jnp.float32)
    out2 = actor_forward(obs2, prepared)
    out2 = jax.block_until_ready(out2)
    ref2 = reference_forward(obs2, params, action_high)
    assert out2.shape == (B2, action_dim)
    assert jnp.allclose(out2, ref2, atol=3e-2, rtol=3e-2), "mismatch vs reference (tiled batch)"

    print("KERNEL_OK")
</pallas_src>

<mosaic_0001>
module attributes {stable_mosaic.version = 11 : i64} {
  func.func @actor_kernel(%arg0: i32, %arg1: memref<2x16xf32, #tpu.memory_space<vmem>>, %arg2: memref<16x256xbf16, #tpu.memory_space<vmem>>, %arg3: memref<1x256xbf16, #tpu.memory_space<vmem>>, %arg4: memref<256x256xbf16, #tpu.memory_space<vmem>>, %arg5: memref<1x256xbf16, #tpu.memory_space<vmem>>, %arg6: memref<256x256xbf16, #tpu.memory_space<vmem>>, %arg7: memref<1x256xbf16, #tpu.memory_space<vmem>>, %arg8: memref<256x256xbf16, #tpu.memory_space<vmem>>, %arg9: memref<1x256xbf16, #tpu.memory_space<vmem>>, %arg10: memref<256x4xbf16, #tpu.memory_space<vmem>>, %arg11: memref<1x4xf32, #tpu.memory_space<vmem>>, %arg12: memref<1x4xf32, #tpu.memory_space<vmem>>, %arg13: memref<2x4xf32, #tpu.memory_space<vmem>>) attributes {dimension_semantics = [#tpu.dimension_semantics<parallel>], iteration_bounds = array<i64: 1>, scalar_prefetch = 0 : i64, scratch_operands = 0 : i64, tpu.core_type = #tpu.core_type<tc>, window_params = [{transform_indices = @transform_0, window_bounds = array<i64: 2, 16>}, {pipeline_mode = #tpu.pipeline_mode<synchronous>, transform_indices = @transform_1, window_bounds = array<i64: 16, 256>}, {pipeline_mode = #tpu.pipeline_mode<synchronous>, transform_indices = @transform_2, window_bounds = array<i64: 1, 256>}, {pipeline_mode = #tpu.pipeline_mode<synchronous>, transform_indices = @transform_3, window_bounds = array<i64: 256, 256>}, {pipeline_mode = #tpu.pipeline_mode<synchronous>, transform_indices = @transform_4, window_bounds = array<i64: 1, 256>}, {pipeline_mode = #tpu.pipeline_mode<synchronous>, transform_indices = @transform_5, window_bounds = array<i64: 256, 256>}, {pipeline_mode = #tpu.pipeline_mode<synchronous>, transform_indices = @transform_6, window_bounds = array<i64: 1, 256>}, {pipeline_mode = #tpu.pipeline_mode<synchronous>, transform_indices = @transform_7, window_bounds = array<i64: 256, 256>}, {pipeline_mode = #tpu.pipeline_mode<synchronous>, transform_indices = @transform_8, window_bounds = array<i64: 1, 256>}, {pipeline_mode = #tpu.pipeline_mode<synchronous>, transform_indices = @transform_9, window_bounds = array<i64: 256, 4>}, {pipeline_mode = #tpu.pipeline_mode<synchronous>, transform_indices = @transform_10, window_bounds = array<i64: 1, 4>}, {pipeline_mode = #tpu.pipeline_mode<synchronous>, transform_indices = @transform_11, window_bounds = array<i64: 1, 4>}, {transform_indices = @transform_12, window_bounds = array<i64: 2, 4>}]} {
    %c0 = arith.constant 0 : index
    %c0_0 = arith.constant 0 : index
    %0 = vector.load %arg1[%c0, %c0_0] : memref<2x16xf32, #tpu.memory_space<vmem>>, vector<2x16xf32>
    %1 = arith.truncf %0 : vector<2x16xf32> to vector<2x16xbf16>
    %c0_1 = arith.constant 0 : index
    %c0_2 = arith.constant 0 : index
    %2 = vector.load %arg2[%c0_1, %c0_2] : memref<16x256xbf16, #tpu.memory_space<vmem>>, vector<16x256xbf16>
    %cst = arith.constant dense<0.000000e+00> : vector<2x256xf32>
    %3 = tpu.matmul %1, %2, %cst {dimension_numbers = #tpu.dot_dimension_numbers<[1], [0], [0], [1], [0, 0, 1, 1], [], []>} : vector<2x16xbf16>, vector<16x256xbf16>, vector<2x256xf32> -> vector<2x256xf32>
    %4 = arith.truncf %3 : vector<2x256xf32> to vector<2x256xbf16>
    %c0_3 = arith.constant 0 : index
    %c0_4 = arith.constant 0 : index
    %5 = vector.load %arg3[%c0_3, %c0_4] : memref<1x256xbf16, #tpu.memory_space<vmem>>, vector<1x256xbf16>
    %6 = vector.broadcast %5 : vector<1x256xbf16> to vector<2x256xbf16>
    %7 = arith.addf %4, %6 : vector<2x256xbf16>
    %cst_5 = arith.constant 0.000000e+00 : bf16
    %8 = vector.broadcast %cst_5 : bf16 to vector<2x256xbf16>
    %9 = arith.maximumf %7, %8 : vector<2x256xbf16>
    %c0_6 = arith.constant 0 : index
    %c0_7 = arith.constant 0 : index
    %10 = vector.load %arg4[%c0_6, %c0_7] : memref<256x256xbf16, #tpu.memory_space<vmem>>, vector<256x256xbf16>
    %cst_8 = arith.constant dense<0.000000e+00> : vector<2x256xf32>
    %11 = tpu.matmul %9, %10, %cst_8 {dimension_numbers = #tpu.dot_dimension_numbers<[1], [0], [0], [1], [0, 0, 1, 1], [], []>} : vector<2x256xbf16>, vector<256x256xbf16>, vector<2x256xf32> -> vector<2x256xf32>
    %12 = arith.truncf %11 : vector<2x256xf32> to vector<2x256xbf16>
    %c0_9 = arith.constant 0 : index
    %c0_10 = arith.constant 0 : index
    %13 = vector.load %arg5[%c0_9, %c0_10] : memref<1x256xbf16, #tpu.memory_space<vmem>>, vector<1x256xbf16>
    %14 = vector.broadcast %13 : vector<1x256xbf16> to vector<2x256xbf16>
    %15 = arith.addf %12, %14 : vector<2x256xbf16>
    %cst_11 = arith.constant 0.000000e+00 : bf16
    %16 = vector.broadcast %cst_11 : bf16 to vector<2x256xbf16>
    %17 = arith.maximumf %15, %16 : vector<2x256xbf16>
    %c0_12 = arith.constant 0 : index
    %c0_13 = arith.constant 0 : index
    %18 = vector.load %arg6[%c0_12, %c0_13] : memref<256x256xbf16, #tpu.memory_space<vmem>>, vector<256x256xbf16>
    %cst_14 = arith.constant dense<0.000000e+00> : vector<2x256xf32>
    %19 = tpu.matmul %17, %18, %cst_14 {dimension_numbers = #tpu.dot_dimension_numbers<[1], [0], [0], [1], [0, 0, 1, 1], [], []>} : vector<2x256xbf16>, vector<256x256xbf16>, vector<2x256xf32> -> vector<2x256xf32>
    %20 = arith.truncf %19 : vector<2x256xf32> to vector<2x256xbf16>
    %c0_15 = arith.constant 0 : index
    %c0_16 = arith.constant 0 : index
    %21 = vector.load %arg7[%c0_15, %c0_16] : memref<1x256xbf16, #tpu.memory_space<vmem>>, vector<1x256xbf16>
    %22 = vector.broadcast %21 : vector<1x256xbf16> to vector<2x256xbf16>
    %23 = arith.addf %20, %22 : vector<2x256xbf16>
    %cst_17 = arith.constant 0.000000e+00 : bf16
    %24 = vector.broadcast %cst_17 : bf16 to vector<2x256xbf16>
    %25 = arith.maximumf %23, %24 : vector<2x256xbf16>
    %c0_18 = arith.constant 0 : index
    %c0_19 = arith.constant 0 : index
    %26 = vector.load %arg8[%c0_18, %c0_19] : memref<256x256xbf16, #tpu.memory_space<vmem>>, vector<256x256xbf16>
    %cst_20 = arith.constant dense<0.000000e+00> : vector<2x256xf32>
    %27 = tpu.matmul %25, %26, %cst_20 {dimension_numbers = #tpu.dot_dimension_numbers<[1], [0], [0], [1], [0, 0, 1, 1], [], []>} : vector<2x256xbf16>, vector<256x256xbf16>, vector<2x256xf32> -> vector<2x256xf32>
    %28 = arith.truncf %27 : vector<2x256xf32> to vector<2x256xbf16>
    %c0_21 = arith.constant 0 : index
    %c0_22 = arith.constant 0 : index
    %29 = vector.load %arg9[%c0_21, %c0_22] : memref<1x256xbf16, #tpu.memory_space<vmem>>, vector<1x256xbf16>
    %30 = vector.broadcast %29 : vector<1x256xbf16> to vector<2x256xbf16>
    %31 = arith.addf %28, %30 : vector<2x256xbf16>
    %cst_23 = arith.constant 0.000000e+00 : bf16
    %32 = vector.broadcast %cst_23 : bf16 to vector<2x256xbf16>
    %33 = arith.maximumf %31, %32 : vector<2x256xbf16>
    %c0_24 = arith.constant 0 : index
    %c0_25 = arith.constant 0 : index
    %34 = vector.load %arg10[%c0_24, %c0_25] : memref<256x4xbf16, #tpu.memory_space<vmem>>, vector<256x4xbf16>
    %cst_26 = arith.constant dense<0.000000e+00> : vector<2x4xf32>
    %35 = tpu.matmul %33, %34, %cst_26 {dimension_numbers = #tpu.dot_dimension_numbers<[1], [0], [0], [1], [0, 0, 1, 1], [], []>} : vector<2x256xbf16>, vector<256x4xbf16>, vector<2x4xf32> -> vector<2x4xf32>
    %c0_27 = arith.constant 0 : index
    %c0_28 = arith.constant 0 : index
    %36 = vector.load %arg11[%c0_27, %c0_28] : memref<1x4xf32, #tpu.memory_space<vmem>>, vector<1x4xf32>
    %37 = vector.broadcast %36 : vector<1x4xf32> to vector<2x4xf32>
    %38 = arith.addf %35, %37 : vector<2x4xf32>
    %39 = math.tanh %38 : vector<2x4xf32>
    %c0_29 = arith.constant 0 : index
    %c0_30 = arith.constant 0 : index
    %40 = vector.load %arg12[%c0_29, %c0_30] : memref<1x4xf32, #tpu.memory_space<vmem>>, vector<1x4xf32>
    %41 = vector.broadcast %40 : vector<1x4xf32> to vector<2x4xf32>
    %42 = arith.mulf %39, %41 : vector<2x4xf32>
    %c0_31 = arith.constant 0 : index
    %c0_32 = arith.constant 0 : index
    %43 = vector.load %arg13[%c0_31, %c0_32] : memref<2x4xf32, #tpu.memory_space<vmem>>, vector<2x4xf32>
    tpu.vector_store %arg13[%c0_31, %c0_32], %42 {strides = array<i32>} : memref<2x4xf32, #tpu.memory_space<vmem>>, vector<2x4xf32>,
    return
  }
  func.func @transform_0(%arg0: i32) -> (i32, i32) {
    %c0_i32 = arith.constant 0 : i32
    %c0_i32_0 = arith.constant 0 : i32
    return %arg0, %c0_i32 : i32, i32
  }
  func.func @transform_1(%arg0: i32) -> (i32, i32) {
    %c0_i32 = arith.constant 0 : i32
    %c0_i32_0 = arith.constant 0 : i32
    %c0_i32_1 = arith.constant 0 : i32
    return %c0_i32, %c0_i32_0 : i32, i32
  }
  func.func @transform_2(%arg0: i32) -> (i32, i32) {
    %c0_i32 = arith.constant 0 : i32
    %c0_i32_0 = arith.constant 0 : i32
    %c0_i32_1 = arith.constant 0 : i32
    return %c0_i32, %c0_i32_0 : i32, i32
  }
  func.func @transform_3(%arg0: i32) -> (i32, i32) {
    %c0_i32 = arith.constant 0 : i32
    %c0_i32_0 = arith.constant 0 : i32
    %c0_i32_1 = arith.constant 0 : i32
    return %c0_i32, %c0_i32_0 : i32, i32
  }
  func.func @transform_4(%arg0: i32) -> (i32, i32) {
    %c0_i32 = arith.constant 0 : i32
    %c0_i32_0 = arith.constant 0 : i32
    %c0_i32_1 = arith.constant 0 : i32
    return %c0_i32, %c0_i32_0 : i32, i32
  }
  func.func @transform_5(%arg0: i32) -> (i32, i32) {
    %c0_i32 = arith.constant 0 : i32
    %c0_i32_0 = arith.constant 0 : i32
    %c0_i32_1 = arith.constant 0 : i32
    return %c0_i32, %c0_i32_0 : i32, i32
  }
  func.func @transform_6(%arg0: i32) -> (i32, i32) {
    %c0_i32 = arith.constant 0 : i32
    %c0_i32_0 = arith.constant 0 : i32
    %c0_i32_1 = arith.constant 0 : i32
    return %c0_i32, %c0_i32_0 : i32, i32
  }
  func.func @transform_7(%arg0: i32) -> (i32, i32) {
    %c0_i32 = arith.constant 0 : i32
    %c0_i32_0 = arith.constant 0 : i32
    %c0_i32_1 = arith.constant 0 : i32
    return %c0_i32, %c0_i32_0 : i32, i32
  }
  func.func @transform_8(%arg0: i32) -> (i32, i32) {
    %c0_i32 = arith.constant 0 : i32
    %c0_i32_0 = arith.constant 0 : i32
    %c0_i32_1 = arith.constant 0 : i32
    return %c0_i32, %c0_i32_0 : i32, i32
  }
  func.func @transform_9(%arg0: i32) -> (i32, i32) {
    %c0_i32 = arith.constant 0 : i32
    %c0_i32_0 = arith.constant 0 : i32
    %c0_i32_1 = arith.constant 0 : i32
    return %c0_i32, %c0_i32_0 : i32, i32
  }
  func.func @transform_10(%arg0: i32) -> (i32, i32) {
    %c0_i32 = arith.constant 0 : i32
    %c0_i32_0 = arith.constant 0 : i32
    %c0_i32_1 = arith.constant 0 : i32
    return %c0_i32, %c0_i32_0 : i32, i32
  }
  func.func @transform_11(%arg0: i32) -> (i32, i32) {
    %c0_i32 = arith.constant 0 : i32
    %c0_i32_0 = arith.constant 0 : i32
    %c0_i32_1 = arith.constant 0 : i32
    return %c0_i32, %c0_i32_0 : i32, i32
  }
  func.func @transform_12(%arg0: i32) -> (i32, i32) {
    %c0_i32 = arith.constant 0 : i32
    %c0_i32_0 = arith.constant 0 : i32
    return %arg0, %c0_i32 : i32, i32
  }
}

</mosaic_0001>

<llo_original>
// kernel: tpu_custom_call.1
$region0: #{tpu_custom_call.1}
  #allocation0 [shape = 'u32[]', space=smem, size = 0x4, offset = 0x4, fixed_abs, tag = 'smem constant byte address 0x4 - core index']
  #allocation1 [shape = 'u32[144,128]{1,0:T(1,128)}', space=vmem, size = 0x12000, scoped, tag = 'internal scratch']
  %s0 = inlined_call_operand.vmem [shape: f32[2,16], index: 0, kind: input, shape index: {}]
  %s1 = inlined_call_operand.vmem [shape: bf16[16,256], index: 1, kind: input, shape index: {}]
  %s2 = inlined_call_operand.vmem [shape: bf16[1,256], index: 2, kind: input, shape index: {}]
  %s3 = inlined_call_operand.hbm [shape: bf16[256,256], index: 3, kind: input, shape index: {}]
  %s4 = inlined_call_operand.vmem [shape: bf16[1,256], index: 4, kind: input, shape index: {}]
  %s5 = inlined_call_operand.hbm [shape: bf16[256,256], index: 5, kind: input, shape index: {}]
  %s6 = inlined_call_operand.vmem [shape: bf16[1,256], index: 6, kind: input, shape index: {}]
  %s7 = inlined_call_operand.hbm [shape: bf16[256,256], index: 7, kind: input, shape index: {}]
  %s8 = inlined_call_operand.vmem [shape: bf16[1,256], index: 8, kind: input, shape index: {}]
  %s9 = inlined_call_operand.vmem [shape: bf16[256,4], index: 9, kind: input, shape index: {}]
  %s10 = inlined_call_operand.vmem [shape: f32[1,4], index: 10, kind: input, shape index: {}]
  %s11 = inlined_call_operand.vmem [shape: f32[1,4], index: 11, kind: input, shape index: {}]
  %s12 = inlined_call_operand.hbm [shape: f32[2,4], index: 12, kind: output, shape index: {}]
  %s13 = sld [smem:[#allocation0]]
  $region70: #{tpu_custom_call.1} parent=0
    _
  %s15 = ssub.s32 1, %s13
  %s16 = scalar_select 0, %s15, %s13
  $region1: #{tpu_custom_call.1} parent=0
    #allocation2 [shape = 'u8[131072]{0}', space=vmem, size = 0x20000, scoped, tag = 'input window, operand 3, single buffered']
    #allocation3 [shape = 's32[1]{0}', space=sflag, size = 0x4, scoped, tag = 'scoped memory for tpu_custom_call.1']
    #allocation4 [shape = 's32[1]{0}', space=sflag, size = 0x4, scoped, tag = 'scoped memory for tpu_custom_call.1']
    #allocation5 [shape = 'u8[131072]{0}', space=vmem, size = 0x20000, scoped, tag = 'input window, operand 5, single buffered']
    #allocation6 [shape = 's32[1]{0}', space=sflag, size = 0x4, scoped, tag = 'scoped memory for tpu_custom_call.1']
    #allocation7 [shape = 'u8[131072]{0}', space=vmem, size = 0x20000, scoped, tag = 'input window, operand 7, single buffered']
    #allocation8 [shape = 'u8[1024]{0}', space=vmem, size = 0x400, scoped, tag = 'output window, operand 0, single buffered']
    %17 = vsyncpa [#allocation3], 0
    %18 = vsyncpa [#allocation6], 0
    %19 = vsyncpa [#allocation4], 0
    // Predicated region
    $region2: #{tpu_custom_call.1} parent=1 // pred_check
      _
    $region3: #{tpu_custom_call.1} parent=1 // pred_check_branch
      %21 = sbr.rel (0) target = $region5
    $region4: #{tpu_custom_call.1} parent=1 // pred_region
      _
    $region5: #{tpu_custom_call.1} parent=1 // pred_fallthru
      _
    // Predicated region
    $region6: #{tpu_custom_call.1} parent=1 // pred_check
      _
    $region7: #{tpu_custom_call.1} parent=1 // pred_check_branch
      %23 = sbr.rel (0) target = $region9
    $region8: #{tpu_custom_call.1} parent=1 // pred_region
      _
    $region9: #{tpu_custom_call.1} parent=1 // pred_fallthru
      _
    // Predicated region
    $region10: #{tpu_custom_call.1} parent=1 // pred_check
      _
    $region11: #{tpu_custom_call.1} parent=1 // pred_check_branch
      %25 = sbr.rel (0) target = $region13
    $region12: #{tpu_custom_call.1} parent=1 // pred_region
      _
    $region13: #{tpu_custom_call.1} parent=1 // pred_fallthru
      _
    // Predicated region
    $region14: #{tpu_custom_call.1} parent=1 // pred_check
      _
    $region15: #{tpu_custom_call.1} parent=1 // pred_check_branch
      %27 = sbr.rel (0) target = $region17
    $region16: #{tpu_custom_call.1} parent=1 // pred_region
      %s29 = ssub.s32 4096, 4096
      %30 = vsyncadd [#allocation3], %s29
      %s31 = sshll.u32 [#allocation2], 4
      %s32 = int_to_ptr.vmem [resolvable:$true] %s31
      %37 = dma.hbm_to_vmem [thread:$0]  %s3, 4096, %s32, [#allocation3], 128, 128, 8
    $region17: #{tpu_custom_call.1} parent=1 // pred_fallthru
      _
    // Predicated region
    $region18: #{tpu_custom_call.1} parent=1 // pred_check
      _
    $region19: #{tpu_custom_call.1} parent=1 // pred_check_branch
      %39 = sbr.rel (0) target = $region21
    $region20: #{tpu_custom_call.1} parent=1 // pred_region
      _
    $region21: #{tpu_custom_call.1} parent=1 // pred_fallthru
      _
    // Predicated region
    $region22: #{tpu_custom_call.1} parent=1 // pred_check
      _
    $region23: #{tpu_custom_call.1} parent=1 // pred_check_branch
      %41 = sbr.rel (0) target = $region25
    $region24: #{tpu_custom_call.1} parent=1 // pred_region
      %s43 = ssub.s32 4096, 4096
      %44 = vsyncadd [#allocation6], %s43
      %s45 = sshll.u32 [#allocation5], 4
      %s46 = int_to_ptr.vmem [resolvable:$true] %s45
      %51 = dma.hbm_to_vmem [thread:$0]  %s5, 4096, %s46, [#allocation6], 128, 128, 8
    $region25: #{tpu_custom_call.1} parent=1 // pred_fallthru
      _
    // Predicated region
    $region26: #{tpu_custom_call.1} parent=1 // pred_check
      _
    $region27: #{tpu_custom_call.1} parent=1 // pred_check_branch
      %53 = sbr.rel (0) target = $region29
    $region28: #{tpu_custom_call.1} parent=1 // pred_region
      _
    $region29: #{tpu_custom_call.1} parent=1 // pred_fallthru
      _
    // Predicated region
    $region30: #{tpu_custom_call.1} parent=1 // pred_check
      _
    $region31: #{tpu_custom_call.1} parent=1 // pred_check_branch
      %55 = sbr.rel (0) target = $region33
    $region32: #{tpu_custom_call.1} parent=1 // pred_region
      %s57 = ssub.s32 4096, 4096
      %58 = vsyncadd [#allocation6], %s57
      %s59 = sshll.u32 [#allocation7], 4
      %s60 = int_to_ptr.vmem [resolvable:$true] %s59
      %65 = dma.hbm_to_vmem [thread:$0]  %s7, 4096, %s60, [#allocation6], 128, 128, 8
    $region33: #{tpu_custom_call.1} parent=1 // pred_fallthru
      _
    // Predicated region
    $region34: #{tpu_custom_call.1} parent=1 // pred_check
      _
    $region35: #{tpu_custom_call.1} parent=1 // pred_check_branch
      %67 = sbr.rel (0) target = $region37
    $region36: #{tpu_custom_call.1} parent=1 // pred_region
      _
    $region37: #{tpu_custom_call.1} parent=1 // pred_fallthru
      _
    // Predicated region
    $region38: #{tpu_custom_call.1} parent=1 // pred_check
      _
    $region39: #{tpu_custom_call.1} parent=1 // pred_check_branch
      %69 = sbr.rel (0) target = $region41
    $region40: #{tpu_custom_call.1} parent=1 // pred_region
      _
    $region41: #{tpu_custom_call.1} parent=1 // pred_fallthru
      _
    // Predicated region
    $region42: #{tpu_custom_call.1} parent=1 // pred_check
      _
    $region43: #{tpu_custom_call.1} parent=1 // pred_check_branch
      %71 = sbr.rel (0) target = $region45
    $region44: #{tpu_custom_call.1} parent=1 // pred_region
      _
    $region45: #{tpu_custom_call.1} parent=1 // pred_fallthru
      _
    // Predicated region
    $region46: #{tpu_custom_call.1} parent=1 // pred_check
      _
    $region47: #{tpu_custom_call.1} parent=1 // pred_check_branch
      %73 = sbr.rel (0) target = $region49
    $region48: #{tpu_custom_call.1} parent=1 // pred_region
      _
    $region49: #{tpu_custom_call.1} parent=1 // pred_fallthru
      _
    // Predicated region
    $region50: #{tpu_custom_call.1} parent=1 // pred_check
      _
    $region51: #{tpu_custom_call.1} parent=1 // pred_check_branch
      %75 = sbr.rel (0) target = $region53
    $region52: #{tpu_custom_call.1} parent=1 // pred_region
      %76 = dma.done [#allocation3], 4096
    $region53: #{tpu_custom_call.1} parent=1 // pred_fallthru
      _
    // Predicated region
    $region54: #{tpu_custom_call.1} parent=1 // pred_check
      _
    $region55: #{tpu_custom_call.1} parent=1 // pred_check_branch
      %78 = sbr.rel (0) target = $region57
    $region56: #{tpu_custom_call.1} parent=1 // pred_region
      %79 = dma.done [#allocation6], 4096
    $region57: #{tpu_custom_call.1} parent=1 // pred_fallthru
      _
    // Predicated region
    $region58: #{tpu_custom_call.1} parent=1 // pred_check
      _
    $region59: #{tpu_custom_call.1} parent=1 // pred_check_branch
      %81 = sbr.rel (0) target = $region61
    $region60: #{tpu_custom_call.1} parent=1 // pred_region
      %82 = dma.done [#allocation6], 4096
    $region61: #{tpu_custom_call.1} parent=1 // pred_fallthru
      _
    %v84 = vld [vmem:[%s0] sm:$0x3]
    %v85 = vpack.c.bf16 %v84, %v84
    %v86 = vld [vmem:[%s1] sm:$0xff]
    %v87 = vld [vmem:[%s1 + $0x8] sm:$0xff]
    %v90 = vunpack.c.l.b16 %v86
    %v91 = vunpack.c.h.b16 %v86
    %v92 = vunpack.c.l.b16 %v87
    %v93 = vunpack.c.h.b16 %v87
    %v94 = vpack.c.b16 %v92, %v90
    %v95 = vpack.c.b16 %v93, %v91
    %vm98 = vcmask 130048
    %v100 = vsel %vm98, %v85, 0
    %102 = vmatprep.subr.bf16.mxu0 0
    %103 = vmatpush1.bf16.msra.mxu0 0
    %104 = vmatprep.subr.bf16.mxu0 0
    %105 = vmatpush1.bf16.msra.mxu0 0
    %106 = vmatprep.subr.bf16.mxu0 0
    %107 = vmatpush1.bf16.msra.mxu0 0
    %108 = vmatprep.subr.bf16.mxu0 0
    %109 = vmatpush1.bf16.msra.mxu0 0
    %110 = vmatprep.subr.bf16.mxu0 0
    %111 = vmatpush1.bf16.msra.mxu0 0
    %112 = vmatprep.subr.bf16.mxu0 0
    %113 = vmatpush1.bf16.msra.mxu0 0
    %114 = vmatprep.subr.bf16.mxu0 0
    %115 = vmatpush1.bf16.msra.mxu0 0
    %116 = vmatprep.subr.bf16.mxu0 %v95
    %117 = vmatpush1.bf16.msra.mxu0 %v94
    %118 = vmatprep.subr.bf16.mxu0 0
    %119 = vmatpush2.bf16.msra.mxu0 0
    %120 = vmatprep.subr.bf16.mxu0 0
    %121 = vmatpush2.bf16.msra.mxu0 0
    %122 = vmatprep.subr.bf16.mxu0 0
    %123 = vmatpush2.bf16.msra.mxu0 0
    %124 = vmatprep.subr.bf16.mxu0 0
    %125 = vmatpush2.bf16.msra.mxu0 0
    %126 = vmatprep.subr.bf16.mxu0 0
    %127 = vmatpush2.bf16.msra.mxu0 0
    %128 = vmatprep.subr.bf16.mxu0 0
    %129 = vmatpush2.bf16.msra.mxu0 0
    %130 = vmatprep.subr.bf16.mxu0 0
    %131 = vmatpush2.bf16.msra.mxu0 0
    %132 = vmatprep.subr.bf16.mxu0 0
    %133 = vmatpush2.bf16.msra.mxu0 0
    %134 = vmatprep.mubr.bf16.mxu0 0
    %135 = vmatmul.mubr.bf16.gmra.mxu0 %v100
    %v136 = vpop.f32.mrf.mxu0
    %v137 = vadd.f32 0.0, %v136
    %v138 = vpop.f32.mrf.mxu0
    %v139 = vadd.f32 0.0, %v138
    %v140 = vpop.f32.mrf.mxu0
    %v141 = vpop.f32.mrf.mxu0
    %142 = vdwg.mxu0
    %v143 = vpack.c.bf16 %v137, %v137
    %v144 = vpack.c.bf16 %v139, %v139
    %v145 = vld [vmem:[%s2] sm:$0x3]
    %v148 = vunpack.c.l.s4 1966171168
    %v149 = vunpack.c.0.s8 %v148
    %v150 = vlaneseq
    %v151 = vshrl.u32 %v150, 7
    %v152 = vsub.s32 %v149, %v151
    %v153 = vrot.slane %v145, %v152
    %v154 = vcombine.high %v153, %v153
    %v156 = vunpack.c.l.s4 1966171168
    %v157 = vunpack.c.0.s8 %v156
    %v158 = vlaneseq
    %v159 = vshrl.u32 %v158, 7
    %v160 = vsub.s32 %v157, %v159
    %v161 = vrot.slane %v153, %v160
    %v163 = vunpack.c.l.s4 1966171168
    %v164 = vunpack.c.0.s8 %v163
    %v165 = vlaneseq
    %v166 = vshrl.u32 %v165, 7
    %v167 = vsub.s32 %v164, %v166
    %v168 = vrot.slane %v154, %v167
    %v170 = vpack.i.b16 %v161, %v161
    %v172 = vlaneseq
    %v173 = vshrl.u32 %v172, 7
    %v174 = vsub.s32 0, %v173
    %v175 = vrot.slane %v170, %v174
    %v177 = vpack.i.b16 %v168, %v168
    %v179 = vlaneseq
    %v180 = vshrl.u32 %v179, 7
    %v181 = vsub.s32 0, %v180
    %v182 = vrot.slane %v177, %v181
    %v183 = vadd.bf16 %v143, %v175
    %v184 = vadd.bf16 %v144, %v182
    %v185 = vmax.bf16 %v183, 0
    %v186 = vmax.bf16 %v184, 0
    %v187 = vld [vmem:[#allocation2] sm:$0xff]
    %v188 = vld [vmem:[#allocation2 + $0x8] sm:$0xff]
    %v189 = vld [vmem:[#allocation2 + $0x10] sm:$0xff]
    %v190 = vld [vmem:[#allocation2 + $0x18] sm:$0xff]
    %v191 = vld [vmem:[#allocation2 + $0x20] sm:$0xff]
    %v192 = vld [vmem:[#allocation2 + $0x28] sm:$0xff]
    %v193 = vld [vmem:[#allocation2 + $0x30] sm:$0xff]
    %v194 = vld [vmem:[#allocation2 + $0x38] sm:$0xff]
    %v195 = vld [vmem:[#allocation2 + $0x40] sm:$0xff]
    %v196 = vld [vmem:[#allocation2 + $0x48] sm:$0xff]
    %v197 = vld [vmem:[#allocation2 + $0x50] sm:$0xff]
    %v198 = vld [vmem:[#allocation2 + $0x58] sm:$0xff]
    %v199 = vld [vmem:[#allocation2 + $0x60] sm:$0xff]
    %v200 = vld [vmem:[#allocation2 + $0x68] sm:$0xff]
    %v201 = vld [vmem:[#allocation2 + $0x70] sm:$0xff]
    %v202 = vld [vmem:[#allocation2 + $0x78] sm:$0xff]
    %v203 = vld [vmem:[#allocation2 + $0x80] sm:$0xff]
    %v204 = vld [vmem:[#allocation2 + $0x88] sm:$0xff]
    %v205 = vld [vmem:[#allocation2 + $0x90] sm:$0xff]
    %v206 = vld [vmem:[#allocation2 + $0x98] sm:$0xff]
    %v207 = vld [vmem:[#allocation2 + $0xa0] sm:$0xff]
    %v208 = vld [vmem:[#allocation2 + $0xa8] sm:$0xff]
    %v209 = vld [vmem:[#allocation2 + $0xb0] sm:$0xff]
    %v210 = vld [vmem:[#allocation2 + $0xb8] sm:$0xff]
    %v211 = vld [vmem:[#allocation2 + $0xc0] sm:$0xff]
    %v212 = vld [vmem:[#allocation2 + $0xc8] sm:$0xff]
    %v213 = vld [vmem:[#allocation2 + $0xd0] sm:$0xff]
    %v214 = vld [vmem:[#allocation2 + $0xd8] sm:$0xff]
    %v215 = vld [vmem:[#allocation2 + $0xe0] sm:$0xff]
    %v216 = vld [vmem:[#allocation2 + $0xe8] sm:$0xff]
    %v217 = vld [vmem:[#allocation2 + $0xf0] sm:$0xff]
    %v218 = vld [vmem:[#allocation2 + $0xf8] sm:$0xff]
    %v251 = vunpack.c.l.b16 %v187
    %v252 = vunpack.c.h.b16 %v187
    %v253 = vunpack.c.l.b16 %v188
    %v254 = vunpack.c.h.b16 %v188
    %v255 = vunpack.c.l.b16 %v189
    %v256 = vunpack.c.h.b16 %v189
    %v257 = vunpack.c.l.b16 %v190
    %v258 = vunpack.c.h.b16 %v190
    %v259 = vunpack.c.l.b16 %v191
    %v260 = vunpack.c.h.b16 %v191
    %v261 = vunpack.c.l.b16 %v192
    %v262 = vunpack.c.h.b16 %v192
    %v263 = vunpack.c.l.b16 %v193
    %v264 = vunpack.c.h.b16 %v193
    %v265 = vunpack.c.l.b16 %v194
    %v266 = vunpack.c.h.b16 %v194
    %v267 = vunpack.c.l.b16 %v195
    %v268 = vunpack.c.h.b16 %v195
    %v269 = vunpack.c.l.b16 %v196
    %v270 = vunpack.c.h.b16 %v196
    %v271 = vunpack.c.l.b16 %v197
    %v272 = vunpack.c.h.b16 %v197
    %v273 = vunpack.c.l.b16 %v198
    %v274 = vunpack.c.h.b16 %v198
    %v275 = vunpack.c.l.b16 %v199
    %v276 = vunpack.c.h.b16 %v199
    %v277 = vunpack.c.l.b16 %v200
    %v278 = vunpack.c.h.b16 %v200
    %v279 = vunpack.c.l.b16 %v201
    %v280 = vunpack.c.h.b16 %v201
    %v281 = vunpack.c.l.b16 %v202
    %v282 = vunpack.c.h.b16 %v202
    %v283 = vunpack.c.l.b16 %v203
    %v284 = vunpack.c.h.b16 %v203
    %v285 = vunpack.c.l.b16 %v204
    %v286 = vunpack.c.h.b16 %v204
    %v287 = vunpack.c.l.b16 %v205
    %v288 = vunpack.c.h.b16 %v205
    %v289 = vunpack.c.l.b16 %v206
    %v290 = vunpack.c.h.b16 %v206
    %v291 = vunpack.c.l.b16 %v207
    %v292 = vunpack.c.h.b16 %v207
    %v293 = vunpack.c.l.b16 %v208
    %v294 = vunpack.c.h.b16 %v208
    %v295 = vunpack.c.l.b16 %v209
    %v296 = vunpack.c.h.b16 %v209
    %v297 = vunpack.c.l.b16 %v210
    %v298 = vunpack.c.h.b16 %v210
    %v299 = vunpack.c.l.b16 %v211
    %v300 = vunpack.c.h.b16 %v211
    %v301 = vunpack.c.l.b16 %v212
    %v302 = vunpack.c.h.b16 %v212
    %v303 = vunpack.c.l.b16 %v213
    %v304 = vunpack.c.h.b16 %v213
    %v305 = vunpack.c.l.b16 %v214
    %v306 = vunpack.c.h.b16 %v214
    %v307 = vunpack.c.l.b16 %v215
    %v308 = vunpack.c.h.b16 %v215
    %v309 = vunpack.c.l.b16 %v216
    %v310 = vunpack.c.h.b16 %v216
    %v311 = vunpack.c.l.b16 %v217
    %v312 = vunpack.c.h.b16 %v217
    %v313 = vunpack.c.l.b16 %v218
    %v314 = vunpack.c.h.b16 %v218
    %v315 = vpack.c.b16 %v253, %v251
    %v316 = vpack.c.b16 %v254, %v252
    %v317 = vpack.c.b16 %v257, %v255
    %v318 = vpack.c.b16 %v258, %v256
    %v319 = vpack.c.b16 %v261, %v259
    %v320 = vpack.c.b16 %v262, %v260
    %v321 = vpack.c.b16 %v265, %v263
    %v322 = vpack.c.b16 %v266, %v264
    %v323 = vpack.c.b16 %v269, %v267
    %v324 = vpack.c.b16 %v270, %v268
    %v325 = vpack.c.b16 %v273, %v271
    %v326 = vpack.c.b16 %v274, %v272
    %v327 = vpack.c.b16 %v277, %v275
    %v328 = vpack.c.b16 %v278, %v276
    %v329 = vpack.c.b16 %v281, %v279
    %v330 = vpack.c.b16 %v282, %v280
    %v331 = vpack.c.b16 %v285, %v283
    %v332 = vpack.c.b16 %v286, %v284
    %v333 = vpack.c.b16 %v289, %v287
    %v334 = vpack.c.b16 %v290, %v288
    %v335 = vpack.c.b16 %v293, %v291
    %v336 = vpack.c.b16 %v294, %v292
    %v337 = vpack.c.b16 %v297, %v295
    %v338 = vpack.c.b16 %v298, %v296
    %v339 = vpack.c.b16 %v301, %v299
    %v340 = vpack.c.b16 %v302, %v300
    %v341 = vpack.c.b16 %v305, %v303
    %v342 = vpack.c.b16 %v306, %v304
    %v343 = vpack.c.b16 %v309, %v307
    %v344 = vpack.c.b16 %v310, %v308
    %v345 = vpack.c.b16 %v313, %v311
    %v346 = vpack.c.b16 %v314, %v312
    %379 = vmatprep.subr.bf16.mxu0 %v330
    %380 = vmatpush1.bf16.msra.mxu0 %v329
    %381 = vmatprep.subr.bf16.mxu0 %v328
    %382 = vmatpush1.bf16.msra.mxu0 %v327
    %383 = vmatprep.subr.bf16.mxu0 %v326
    %384 = vmatpush1.bf16.msra.mxu0 %v325
    %385 = vmatprep.subr.bf16.mxu0 %v324
    %386 = vmatpush1.bf16.msra.mxu0 %v323
    %387 = vmatprep.subr.bf16.mxu0 %v322
    %388 = vmatpush1.bf16.msra.mxu0 %v321
    %389 = vmatprep.subr.bf16.mxu0 %v320
    %390 = vmatpush1.bf16.msra.mxu0 %v319
    %391 = vmatprep.subr.bf16.mxu0 %v318
    %392 = vmatpush1.bf16.msra.mxu0 %v317
    %393 = vmatprep.subr.bf16.mxu0 %v316
    %394 = vmatpush1.bf16.msra.mxu0 %v315
    %395 = vmatprep.subr.bf16.mxu0 %v346
    %396 = vmatpush2.bf16.msra.mxu0 %v345
    %397 = vmatprep.subr.bf16.mxu0 %v344
    %398 = vmatpush2.bf16.msra.mxu0 %v343
    %399 = vmatprep.subr.bf16.mxu0 %v342
    %400 = vmatpush2.bf16.msra.mxu0 %v341
    %401 = vmatprep.subr.bf16.mxu0 %v340
    %402 = vmatpush2.bf16.msra.mxu0 %v339
    %403 = vmatprep.subr.bf16.mxu0 %v338
    %404 = vmatpush2.bf16.msra.mxu0 %v337
    %405 = vmatprep.subr.bf16.mxu0 %v336
    %406 = vmatpush2.bf16.msra.mxu0 %v335
    %407 = vmatprep.subr.bf16.mxu0 %v334
    %408 = vmatpush2.bf16.msra.mxu0 %v333
    %409 = vmatprep.subr.bf16.mxu0 %v332
    %410 = vmatpush2.bf16.msra.mxu0 %v331
    %411 = vmatprep.mubr.bf16.mxu0 %v186
    %412 = vmatmul.mubr.bf16.gmra.mxu0 %v185
    %v413 = vpop.f32.mrf.mxu0
    %v414 = vadd.f32 0.0, %v413
    %v415 = vpop.f32.mrf.mxu0
    %v416 = vadd.f32 0.0, %v415
    %v417 = vpop.f32.mrf.mxu0
    %v418 = vpop.f32.mrf.mxu0
    %419 = vdwg.mxu0
    %v420 = vpack.c.bf16 %v414, %v414
    %v421 = vpack.c.bf16 %v416, %v416
    %v422 = vld [vmem:[%s4] sm:$0x3]
    %v425 = vunpack.c.l.s4 1966171168
    %v426 = vunpack.c.0.s8 %v425
    %v427 = vlaneseq
    %v428 = vshrl.u32 %v427, 7
    %v429 = vsub.s32 %v426, %v428
    %v430 = vrot.slane %v422, %v429
    %v431 = vcombine.high %v430, %v430
    %v433 = vunpack.c.l.s4 1966171168
    %v434 = vunpack.c.0.s8 %v433
    %v435 = vlaneseq
    %v436 = vshrl.u32 %v435, 7
    %v437 = vsub.s32 %v434, %v436
    %v438 = vrot.slane %v430, %v437
    %v440 = vunpack.c.l.s4 1966171168
    %v441 = vunpack.c.0.s8 %v440
    %v442 = vlaneseq
    %v443 = vshrl.u32 %v442, 7
    %v444 = vsub.s32 %v441, %v443
    %v445 = vrot.slane %v431, %v444
    %v447 = vpack.i.b16 %v438, %v438
    %v449 = vlaneseq
    %v450 = vshrl.u32 %v449, 7
    %v451 = vsub.s32 0, %v450
    %v452 = vrot.slane %v447, %v451
    %v454 = vpack.i.b16 %v445, %v445
    %v456 = vlaneseq
    %v457 = vshrl.u32 %v456, 7
    %v458 = vsub.s32 0, %v457
    %v459 = vrot.slane %v454, %v458
    %v460 = vadd.bf16 %v420, %v452
    %v461 = vadd.bf16 %v421, %v459
    %v462 = vmax.bf16 %v460, 0
    %v463 = vmax.bf16 %v461, 0
    %v464 = vld [vmem:[#allocation5] sm:$0xff]
    %v465 = vld [vmem:[#allocation5 + $0x8] sm:$0xff]
    %v466 = vld [vmem:[#allocation5 + $0x10] sm:$0xff]
    %v467 = vld [vmem:[#allocation5 + $0x18] sm:$0xff]
    %v468 = vld [vmem:[#allocation5 + $0x20] sm:$0xff]
    %v469 = vld [vmem:[#allocation5 + $0x28] sm:$0xff]
    %v470 = vld [vmem:[#allocation5 + $0x30] sm:$0xff]
    %v471 = vld [vmem:[#allocation5 + $0x38] sm:$0xff]
    %v472 = vld [vmem:[#allocation5 + $0x40] sm:$0xff]
    %v473 = vld [vmem:[#allocation5 + $0x48] sm:$0xff]
    %v474 = vld [vmem:[#allocation5 + $0x50] sm:$0xff]
    %v475 = vld [vmem:[#allocation5 + $0x58] sm:$0xff]
    %v476 = vld [vmem:[#allocation5 + $0x60] sm:$0xff]
    %v477 = vld [vmem:[#allocation5 + $0x68] sm:$0xff]
    %v478 = vld [vmem:[#allocation5 + $0x70] sm:$0xff]
    %v479 = vld [vmem:[#allocation5 + $0x78] sm:$0xff]
    %v480 = vld [vmem:[#allocation5 + $0x80] sm:$0xff]
    %v481 = vld [vmem:[#allocation5 + $0x88] sm:$0xff]
    %v482 = vld [vmem:[#allocation5 + $0x90] sm:$0xff]
    %v483 = vld [vmem:[#allocation5 + $0x98] sm:$0xff]
    %v484 = vld [vmem:[#allocation5 + $0xa0] sm:$0xff]
    %v485 = vld [vmem:[#allocation5 + $0xa8] sm:$0xff]
    %v486 = vld [vmem:[#allocation5 + $0xb0] sm:$0xff]
    %v487 = vld [vmem:[#allocation5 + $0xb8] sm:$0xff]
    %v488 = vld [vmem:[#allocation5 + $0xc0] sm:$0xff]
    %v489 = vld [vmem:[#allocation5 + $0xc8] sm:$0xff]
    %v490 = vld [vmem:[#allocation5 + $0xd0] sm:$0xff]
    %v491 = vld [vmem:[#allocation5 + $0xd8] sm:$0xff]
    %v492 = vld [vmem:[#allocation5 + $0xe0] sm:$0xff]
    %v493 = vld [vmem:[#allocation5 + $0xe8] sm:$0xff]
    %v494 = vld [vmem:[#allocation5 + $0xf0] sm:$0xff]
    %v495 = vld [vmem:[#allocation5 + $0xf8] sm:$0xff]
    %v528 = vunpack.c.l.b16 %v464
    %v529 = vunpack.c.h.b16 %v464
    %v530 = vunpack.c.l.b16 %v465
    %v531 = vunpack.c.h.b16 %v465
    %v532 = vunpack.c.l.b16 %v466
    %v533 = vunpack.c.h.b16 %v466
    %v534 = vunpack.c.l.b16 %v467
    %v535 = vunpack.c.h.b16 %v467
    %v536 = vunpack.c.l.b16 %v468
    %v537 = vunpack.c.h.b16 %v468
    %v538 = vunpack.c.l.b16 %v469
    %v539 = vunpack.c.h.b16 %v469
    %v540 = vunpack.c.l.b16 %v470
    %v541 = vunpack.c.h.b16 %v470
    %v542 = vunpack.c.l.b16 %v471
    %v543 = vunpack.c.h.b16 %v471
    %v544 = vunpack.c.l.b16 %v472
    %v545 = vunpack.c.h.b16 %v472
    %v546 = vunpack.c.l.b16 %v473
    %v547 = vunpack.c.h.b16 %v473
    %v548 = vunpack.c.l.b16 %v474
    %v549 = vunpack.c.h.b16 %v474
    %v550 = vunpack.c.l.b16 %v475
    %v551 = vunpack.c.h.b16 %v475
    %v552 = vunpack.c.l.b16 %v476
    %v553 = vunpack.c.h.b16 %v476
    %v554 = vunpack.c.l.b16 %v477
    %v555 = vunpack.c.h.b16 %v477
    %v556 = vunpack.c.l.b16 %v478
    %v557 = vunpack.c.h.b16 %v478
    %v558 = vunpack.c.l.b16 %v479
    %v559 = vunpack.c.h.b16 %v479
    %v560 = vunpack.c.l.b16 %v480
    %v561 = vunpack.c.h.b16 %v480
    %v562 = vunpack.c.l.b16 %v481
    %v563 = vunpack.c.h.b16 %v481
    %v564 = vunpack.c.l.b16 %v482
    %v565 = vunpack.c.h.b16 %v482
    %v566 = vunpack.c.l.b16 %v483
    %v567 = vunpack.c.h.b16 %v483
    %v568 = vunpack.c.l.b16 %v484
    %v569 = vunpack.c.h.b16 %v484
    %v570 = vunpack.c.l.b16 %v485
    %v571 = vunpack.c.h.b16 %v485
    %v572 = vunpack.c.l.b16 %v486
    %v573 = vunpack.c.h.b16 %v486
    %v574 = vunpack.c.l.b16 %v487
    %v575 = vunpack.c.h.b16 %v487
    %v576 = vunpack.c.l.b16 %v488
    %v577 = vunpack.c.h.b16 %v488
    %v578 = vunpack.c.l.b16 %v489
    %v579 = vunpack.c.h.b16 %v489
    %v580 = vunpack.c.l.b16 %v490
    %v581 = vunpack.c.h.b16 %v490
    %v582 = vunpack.c.l.b16 %v491
    %v583 = vunpack.c.h.b16 %v491
    %v584 = vunpack.c.l.b16 %v492
    %v585 = vunpack.c.h.b16 %v492
    %v586 = vunpack.c.l.b16 %v493
    %v587 = vunpack.c.h.b16 %v493
    %v588 = vunpack.c.l.b16 %v494
    %v589 = vunpack.c.h.b16 %v494
    %v590 = vunpack.c.l.b16 %v495
    %v591 = vunpack.c.h.b16 %v495
    %v592 = vpack.c.b16 %v530, %v528
    %v593 = vpack.c.b16 %v531, %v529
    %v594 = vpack.c.b16 %v534, %v532
    %v595 = vpack.c.b16 %v535, %v533
    %v596 = vpack.c.b16 %v538, %v536
    %v597 = vpack.c.b16 %v539, %v537
    %v598 = vpack.c.b16 %v542, %v540
    %v599 = vpack.c.b16 %v543, %v541
    %v600 = vpack.c.b16 %v546, %v544
    %v601 = vpack.c.b16 %v547, %v545
    %v602 = vpack.c.b16 %v550, %v548
    %v603 = vpack.c.b16 %v551, %v549
    %v604 = vpack.c.b16 %v554, %v552
    %v605 = vpack.c.b16 %v555, %v553
    %v606 = vpack.c.b16 %v558, %v556
    %v607 = vpack.c.b16 %v559, %v557
    %v608 = vpack.c.b16 %v562, %v560
    %v609 = vpack.c.b16 %v563, %v561
    %v610 = vpack.c.b16 %v566, %v564
    %v611 = vpack.c.b16 %v567, %v565
    %v612 = vpack.c.b16 %v570, %v568
    %v613 = vpack.c.b16 %v571, %v569
    %v614 = vpack.c.b16 %v574, %v572
    %v615 = vpack.c.b16 %v575, %v573
    %v616 = vpack.c.b16 %v578, %v576
    %v617 = vpack.c.b16 %v579, %v577
    %v618 = vpack.c.b16 %v582, %v580
    %v619 = vpack.c.b16 %v583, %v581
    %v620 = vpack.c.b16 %v586, %v584
    %v621 = vpack.c.b16 %v587, %v585
    %v622 = vpack.c.b16 %v590, %v588
    %v623 = vpack.c.b16 %v591, %v589
    %656 = vmatprep.subr.bf16.mxu0 %v607
    %657 = vmatpush1.bf16.msra.mxu0 %v606
    %658 = vmatprep.subr.bf16.mxu0 %v605
    %659 = vmatpush1.bf16.msra.mxu0 %v604
    %660 = vmatprep.subr.bf16.mxu0 %v603
    %661 = vmatpush1.bf16.msra.mxu0 %v602
    %662 = vmatprep.subr.bf16.mxu0 %v601
    %663 = vmatpush1.bf16.msra.mxu0 %v600
    %664 = vmatprep.subr.bf16.mxu0 %v599
    %665 = vmatpush1.bf16.msra.mxu0 %v598
    %666 = vmatprep.subr.bf16.mxu0 %v597
    %667 = vmatpush1.bf16.msra.mxu0 %v596
    %668 = vmatprep.subr.bf16.mxu0 %v595
    %669 = vmatpush1.bf16.msra.mxu0 %v594
    %670 = vmatprep.subr.bf16.mxu0 %v593
    %671 = vmatpush1.bf16.msra.mxu0 %v592
    %672 = vmatprep.subr.bf16.mxu0 %v623
    %673 = vmatpush2.bf16.msra.mxu0 %v622
    %674 = vmatprep.subr.bf16.mxu0 %v621
    %675 = vmatpush2.bf16.msra.mxu0 %v620
    %676 = vmatprep.subr.bf16.mxu0 %v619
    %677 = vmatpush2.bf16.msra.mxu0 %v618
    %678 = vmatprep.subr.bf16.mxu0 %v617
    %679 = vmatpush2.bf16.msra.mxu0 %v616
    %680 = vmatprep.subr.bf16.mxu0 %v615
    %681 = vmatpush2.bf16.msra.mxu0 %v614
    %682 = vmatprep.subr.bf16.mxu0 %v613
    %683 = vmatpush2.bf16.msra.mxu0 %v612
    %684 = vmatprep.subr.bf16.mxu0 %v611
    %685 = vmatpush2.bf16.msra.mxu0 %v610
    %686 = vmatprep.subr.bf16.mxu0 %v609
    %687 = vmatpush2.bf16.msra.mxu0 %v608
    %688 = vmatprep.mubr.bf16.mxu0 %v463
    %689 = vmatmul.mubr.bf16.gmra.mxu0 %v462
    %v690 = vpop.f32.mrf.mxu0
    %v691 = vadd.f32 0.0, %v690
    %v692 = vpop.f32.mrf.mxu0
    %v693 = vadd.f32 0.0, %v692
    %v694 = vpop.f32.mrf.mxu0
    %v695 = vpop.f32.mrf.mxu0
    %696 = vdwg.mxu0
    %v697 = vpack.c.bf16 %v691, %v691
    %v698 = vpack.c.bf16 %v693, %v693
    %v699 = vld [vmem:[%s6] sm:$0x3]
    %v702 = vunpack.c.l.s4 1966171168
    %v703 = vunpack.c.0.s8 %v702
    %v704 = vlaneseq
    %v705 = vshrl.u32 %v704, 7
    %v706 = vsub.s32 %v703, %v705
    %v707 = vrot.slane %v699, %v706
    %v708 = vcombine.high %v707, %v707
    %v710 = vunpack.c.l.s4 1966171168
    %v711 = vunpack.c.0.s8 %v710
    %v712 = vlaneseq
    %v713 = vshrl.u32 %v712, 7
    %v714 = vsub.s32 %v711, %v713
    %v715 = vrot.slane %v707, %v714
    %v717 = vunpack.c.l.s4 1966171168
    %v718 = vunpack.c.0.s8 %v717
    %v719 = vlaneseq
    %v720 = vshrl.u32 %v719, 7
    %v721 = vsub.s32 %v718, %v720
    %v722 = vrot.slane %v708, %v721
    %v724 = vpack.i.b16 %v715, %v715
    %v726 = vlaneseq
    %v727 = vshrl.u32 %v726, 7
    %v728 = vsub.s32 0, %v727
    %v729 = vrot.slane %v724, %v728
    %v731 = vpack.i.b16 %v722, %v722
    %v733 = vlaneseq
    %v734 = vshrl.u32 %v733, 7
    %v735 = vsub.s32 0, %v734
    %v736 = vrot.slane %v731, %v735
    %v737 = vadd.bf16 %v697, %v729
    %v738 = vadd.bf16 %v698, %v736
    %v739 = vmax.bf16 %v737, 0
    %v740 = vmax.bf16 %v738, 0
    %v741 = vld [vmem:[#allocation7] sm:$0xff]
    %v742 = vld [vmem:[#allocation7 + $0x8] sm:$0xff]
    %v743 = vld [vmem:[#allocation7 + $0x10] sm:$0xff]
    %v744 = vld [vmem:[#allocation7 + $0x18] sm:$0xff]
    %v745 = vld [vmem:[#allocation7 + $0x20] sm:$0xff]
    %v746 = vld [vmem:[#allocation7 + $0x28] sm:$0xff]
    %v747 = vld [vmem:[#allocation7 + $0x30] sm:$0xff]
    %v748 = vld [vmem:[#allocation7 + $0x38] sm:$0xff]
    %v749 = vld [vmem:[#allocation7 + $0x40] sm:$0xff]
    %v750 = vld [vmem:[#allocation7 + $0x48] sm:$0xff]
    %v751 = vld [vmem:[#allocation7 + $0x50] sm:$0xff]
    %v752 = vld [vmem:[#allocation7 + $0x58] sm:$0xff]
    %v753 = vld [vmem:[#allocation7 + $0x60] sm:$0xff]
    %v754 = vld [vmem:[#allocation7 + $0x68] sm:$0xff]
    %v755 = vld [vmem:[#allocation7 + $0x70] sm:$0xff]
    %v756 = vld [vmem:[#allocation7 + $0x78] sm:$0xff]
    %v757 = vld [vmem:[#allocation7 + $0x80] sm:$0xff]
    %v758 = vld [vmem:[#allocation7 + $0x88] sm:$0xff]
    %v759 = vld [vmem:[#allocation7 + $0x90] sm:$0xff]
    %v760 = vld [vmem:[#allocation7 + $0x98] sm:$0xff]
    %v761 = vld [vmem:[#allocation7 + $0xa0] sm:$0xff]
    %v762 = vld [vmem:[#allocation7 + $0xa8] sm:$0xff]
    %v763 = vld [vmem:[#allocation7 + $0xb0] sm:$0xff]
    %v764 = vld [vmem:[#allocation7 + $0xb8] sm:$0xff]
    %v765 = vld [vmem:[#allocation7 + $0xc0] sm:$0xff]
    %v766 = vld [vmem:[#allocation7 + $0xc8] sm:$0xff]
    %v767 = vld [vmem:[#allocation7 + $0xd0] sm:$0xff]
    %v768 = vld [vmem:[#allocation7 + $0xd8] sm:$0xff]
    %v769 = vld [vmem:[#allocation7 + $0xe0] sm:$0xff]
    %v770 = vld [vmem:[#allocation7 + $0xe8] sm:$0xff]
    %v771 = vld [vmem:[#allocation7 + $0xf0] sm:$0xff]
    %v772 = vld [vmem:[#allocation7 + $0xf8] sm:$0xff]
    %v805 = vunpack.c.l.b16 %v741
    %v806 = vunpack.c.h.b16 %v741
    %v807 = vunpack.c.l.b16 %v742
    %v808 = vunpack.c.h.b16 %v742
    %v809 = vunpack.c.l.b16 %v743
    %v810 = vunpack.c.h.b16 %v743
    %v811 = vunpack.c.l.b16 %v744
    %v812 = vunpack.c.h.b16 %v744
    %v813 = vunpack.c.l.b16 %v745
    %v814 = vunpack.c.h.b16 %v745
    %v815 = vunpack.c.l.b16 %v746
    %v816 = vunpack.c.h.b16 %v746
    %v817 = vunpack.c.l.b16 %v747
    %v818 = vunpack.c.h.b16 %v747
    %v819 = vunpack.c.l.b16 %v748
    %v820 = vunpack.c.h.b16 %v748
    %v821 = vunpack.c.l.b16 %v749
    %v822 = vunpack.c.h.b16 %v749
    %v823 = vunpack.c.l.b16 %v750
    %v824 = vunpack.c.h.b16 %v750
    %v825 = vunpack.c.l.b16 %v751
    %v826 = vunpack.c.h.b16 %v751
    %v827 = vunpack.c.l.b16 %v752
    %v828 = vunpack.c.h.b16 %v752
    %v829 = vunpack.c.l.b16 %v753
    %v830 = vunpack.c.h.b16 %v753
    %v831 = vunpack.c.l.b16 %v754
    %v832 = vunpack.c.h.b16 %v754
    %v833 = vunpack.c.l.b16 %v755
    %v834 = vunpack.c.h.b16 %v755
    %v835 = vunpack.c.l.b16 %v756
    %v836 = vunpack.c.h.b16 %v756
    %v837 = vunpack.c.l.b16 %v757
    %v838 = vunpack.c.h.b16 %v757
    %v839 = vunpack.c.l.b16 %v758
    %v840 = vunpack.c.h.b16 %v758
    %v841 = vunpack.c.l.b16 %v759
    %v842 = vunpack.c.h.b16 %v759
    %v843 = vunpack.c.l.b16 %v760
    %v844 = vunpack.c.h.b16 %v760
    %v845 = vunpack.c.l.b16 %v761
    %v846 = vunpack.c.h.b16 %v761
    %v847 = vunpack.c.l.b16 %v762
    %v848 = vunpack.c.h.b16 %v762
    %v849 = vunpack.c.l.b16 %v763
    %v850 = vunpack.c.h.b16 %v763
    %v851 = vunpack.c.l.b16 %v764
    %v852 = vunpack.c.h.b16 %v764
    %v853 = vunpack.c.l.b16 %v765
    %v854 = vunpack.c.h.b16 %v765
    %v855 = vunpack.c.l.b16 %v766
    %v856 = vunpack.c.h.b16 %v766
    %v857 = vunpack.c.l.b16 %v767
    %v858 = vunpack.c.h.b16 %v767
    %v859 = vunpack.c.l.b16 %v768
    %v860 = vunpack.c.h.b16 %v768
    %v861 = vunpack.c.l.b16 %v769
    %v862 = vunpack.c.h.b16 %v769
    %v863 = vunpack.c.l.b16 %v770
    %v864 = vunpack.c.h.b16 %v770
    %v865 = vunpack.c.l.b16 %v771
    %v866 = vunpack.c.h.b16 %v771
    %v867 = vunpack.c.l.b16 %v772
    %v868 = vunpack.c.h.b16 %v772
    %v869 = vpack.c.b16 %v807, %v805
    %v870 = vpack.c.b16 %v808, %v806
    %v871 = vpack.c.b16 %v811, %v809
    %v872 = vpack.c.b16 %v812, %v810
    %v873 = vpack.c.b16 %v815, %v813
    %v874 = vpack.c.b16 %v816, %v814
    %v875 = vpack.c.b16 %v819, %v817
    %v876 = vpack.c.b16 %v820, %v818
    %v877 = vpack.c.b16 %v823, %v821
    %v878 = vpack.c.b16 %v824, %v822
    %v879 = vpack.c.b16 %v827, %v825
    %v880 = vpack.c.b16 %v828, %v826
    %v881 = vpack.c.b16 %v831, %v829
    %v882 = vpack.c.b16 %v832, %v830
    %v883 = vpack.c.b16 %v835, %v833
    %v884 = vpack.c.b16 %v836, %v834
    %v885 = vpack.c.b16 %v839, %v837
    %v886 = vpack.c.b16 %v840, %v838
    %v887 = vpack.c.b16 %v843, %v841
    %v888 = vpack.c.b16 %v844, %v842
    %v889 = vpack.c.b16 %v847, %v845
    %v890 = vpack.c.b16 %v848, %v846
    %v891 = vpack.c.b16 %v851, %v849
    %v892 = vpack.c.b16 %v852, %v850
    %v893 = vpack.c.b16 %v855, %v853
    %v894 = vpack.c.b16 %v856, %v854
    %v895 = vpack.c.b16 %v859, %v857
    %v896 = vpack.c.b16 %v860, %v858
    %v897 = vpack.c.b16 %v863, %v861
    %v898 = vpack.c.b16 %v864, %v862
    %v899 = vpack.c.b16 %v867, %v865
    %v900 = vpack.c.b16 %v868, %v866
    %933 = vmatprep.subr.bf16.mxu0 %v884
    %934 = vmatpush1.bf16.msra.mxu0 %v883
    %935 = vmatprep.subr.bf16.mxu0 %v882
    %936 = vmatpush1.bf16.msra.mxu0 %v881
    %937 = vmatprep.subr.bf16.mxu0 %v880
    %938 = vmatpush1.bf16.msra.mxu0 %v879
    %939 = vmatprep.subr.bf16.mxu0 %v878
    %940 = vmatpush1.bf16.msra.mxu0 %v877
    %941 = vmatprep.subr.bf16.mxu0 %v876
    %942 = vmatpush1.bf16.msra.mxu0 %v875
    %943 = vmatprep.subr.bf16.mxu0 %v874
    %944 = vmatpush1.bf16.msra.mxu0 %v873
    %945 = vmatprep.subr.bf16.mxu0 %v872
    %946 = vmatpush1.bf16.msra.mxu0 %v871
    %947 = vmatprep.subr.bf16.mxu0 %v870
    %948 = vmatpush1.bf16.msra.mxu0 %v869
    %949 = vmatprep.subr.bf16.mxu0 %v900
    %950 = vmatpush2.bf16.msra.mxu0 %v899
    %951 = vmatprep.subr.bf16.mxu0 %v898
    %952 = vmatpush2.bf16.msra.mxu0 %v897
    %953 = vmatprep.subr.bf16.mxu0 %v896
    %954 = vmatpush2.bf16.msra.mxu0 %v895
    %955 = vmatprep.subr.bf16.mxu0 %v894
    %956 = vmatpush2.bf16.msra.mxu0 %v893
    %957 = vmatprep.subr.bf16.mxu0 %v892
    %958 = vmatpush2.bf16.msra.mxu0 %v891
    %959 = vmatprep.subr.bf16.mxu0 %v890
    %960 = vmatpush2.bf16.msra.mxu0 %v889
    %961 = vmatprep.subr.bf16.mxu0 %v888
    %962 = vmatpush2.bf16.msra.mxu0 %v887
    %963 = vmatprep.subr.bf16.mxu0 %v886
    %964 = vmatpush2.bf16.msra.mxu0 %v885
    %965 = vmatprep.mubr.bf16.mxu0 %v740
    %966 = vmatmul.mubr.bf16.gmra.mxu0 %v739
    %v967 = vpop.f32.mrf.mxu0
    %v968 = vadd.f32 0.0, %v967
    %v969 = vpop.f32.mrf.mxu0
    %v970 = vadd.f32 0.0, %v969
    %v971 = vpop.f32.mrf.mxu0
    %v972 = vpop.f32.mrf.mxu0
    %973 = vdwg.mxu0
    %v974 = vpack.c.bf16 %v968, %v968
    %v975 = vpack.c.bf16 %v970, %v970
    %v976 = vld [vmem:[%s8] sm:$0x3]
    %v979 = vunpack.c.l.s4 1966171168
    %v980 = vunpack.c.0.s8 %v979
    %v981 = vlaneseq
    %v982 = vshrl.u32 %v981, 7
    %v983 = vsub.s32 %v980, %v982
    %v984 = vrot.slane %v976, %v983
    %v985 = vcombine.high %v984, %v984
    %v987 = vunpack.c.l.s4 1966171168
    %v988 = vunpack.c.0.s8 %v987
    %v989 = vlaneseq
    %v990 = vshrl.u32 %v989, 7
    %v991 = vsub.s32 %v988, %v990
    %v992 = vrot.slane %v984, %v991
    %v994 = vunpack.c.l.s4 1966171168
    %v995 = vunpack.c.0.s8 %v994
    %v996 = vlaneseq
    %v997 = vshrl.u32 %v996, 7
    %v998 = vsub.s32 %v995, %v997
    %v999 = vrot.slane %v985, %v998
    %v1001 = vpack.i.b16 %v992, %v992
    %v1003 = vlaneseq
    %v1004 = vshrl.u32 %v1003, 7
    %v1005 = vsub.s32 0, %v1004
    %v1006 = vrot.slane %v1001, %v1005
    %v1008 = vpack.i.b16 %v999, %v999
    %v1010 = vlaneseq
    %v1011 = vshrl.u32 %v1010, 7
    %v1012 = vsub.s32 0, %v1011
    %v1013 = vrot.slane %v1008, %v1012
    %v1014 = vadd.bf16 %v974, %v1006
    %v1015 = vadd.bf16 %v975, %v1013
    %v1016 = vmax.bf16 %v1014, 0
    %v1017 = vmax.bf16 %v1015, 0
    %v1018 = vld [vmem:[%s9] sm:$0xf]
    %v1019 = vld [vmem:[%s9 + $0x4] sm:$0xf]
    %v1020 = vld [vmem:[%s9 + $0x8] sm:$0xf]
    %v1021 = vld [vmem:[%s9 + $0xc] sm:$0xf]
    %v1022 = vld [vmem:[%s9 + $0x10] sm:$0xf]
    %v1023 = vld [vmem:[%s9 + $0x14] sm:$0xf]
    %v1024 = vld [vmem:[%s9 + $0x18] sm:$0xf]
    %v1025 = vld [vmem:[%s9 + $0x1c] sm:$0xf]
    %v1026 = vld [vmem:[%s9 + $0x20] sm:$0xf]
    %v1027 = vld [vmem:[%s9 + $0x24] sm:$0xf]
    %v1028 = vld [vmem:[%s9 + $0x28] sm:$0xf]
    %v1029 = vld [vmem:[%s9 + $0x2c] sm:$0xf]
    %v1030 = vld [vmem:[%s9 + $0x30] sm:$0xf]
    %v1031 = vld [vmem:[%s9 + $0x34] sm:$0xf]
    %v1032 = vld [vmem:[%s9 + $0x38] sm:$0xf]
    %v1033 = vld [vmem:[%s9 + $0x3c] sm:$0xf]
    %v1034 = vld [vmem:[%s9 + $0x40] sm:$0xf]
    %v1035 = vld [vmem:[%s9 + $0x44] sm:$0xf]
    %v1036 = vld [vmem:[%s9 + $0x48] sm:$0xf]
    %v1037 = vld [vmem:[%s9 + $0x4c] sm:$0xf]
    %v1038 = vld [vmem:[%s9 + $0x50] sm:$0xf]
    %v1039 = vld [vmem:[%s9 + $0x54] sm:$0xf]
    %v1040 = vld [vmem:[%s9 + $0x58] sm:$0xf]
    %v1041 = vld [vmem:[%s9 + $0x5c] sm:$0xf]
    %v1042 = vld [vmem:[%s9 + $0x60] sm:$0xf]
    %v1043 = vld [vmem:[%s9 + $0x64] sm:$0xf]
    %v1044 = vld [vmem:[%s9 + $0x68] sm:$0xf]
    %v1045 = vld [vmem:[%s9 + $0x6c] sm:$0xf]
    %v1046 = vld [vmem:[%s9 + $0x70] sm:$0xf]
    %v1047 = vld [vmem:[%s9 + $0x74] sm:$0xf]
    %v1048 = vld [vmem:[%s9 + $0x78] sm:$0xf]
    %v1049 = vld [vmem:[%s9 + $0x7c] sm:$0xf]
    %v1050 = vld [vmem:[%s10] sm:$0x1]
    %v1052 = vlaneseq
    %v1053 = vshrl.u32 %v1052, 7
    %v1054 = vsub.s32 0, %v1053
    %v1055 = vrot.slane %v1050, %v1054
    %v1089 = vunpack.c.l.b16 %v1018
    %v1090 = vunpack.c.l.b16 %v1019
    %v1091 = vunpack.c.l.b16 %v1020
    %v1092 = vunpack.c.l.b16 %v1021
    %v1093 = vunpack.c.l.b16 %v1022
    %v1094 = vunpack.c.l.b16 %v1023
    %v1095 = vunpack.c.l.b16 %v1024
    %v1096 = vunpack.c.l.b16 %v1025
    %v1097 = vunpack.c.l.b16 %v1026
    %v1098 = vunpack.c.l.b16 %v1027
    %v1099 = vunpack.c.l.b16 %v1028
    %v1100 = vunpack.c.l.b16 %v1029
    %v1101 = vunpack.c.l.b16 %v1030
    %v1102 = vunpack.c.l.b16 %v1031
    %v1103 = vunpack.c.l.b16 %v1032
    %v1104 = vunpack.c.l.b16 %v1033
    %v1105 = vunpack.c.l.b16 %v1034
    %v1106 = vunpack.c.l.b16 %v1035
    %v1107 = vunpack.c.l.b16 %v1036
    %v1108 = vunpack.c.l.b16 %v1037
    %v1109 = vunpack.c.l.b16 %v1038
    %v1110 = vunpack.c.l.b16 %v1039
    %v1111 = vunpack.c.l.b16 %v1040
    %v1112 = vunpack.c.l.b16 %v1041
    %v1113 = vunpack.c.l.b16 %v1042
    %v1114 = vunpack.c.l.b16 %v1043
    %v1115 = vunpack.c.l.b16 %v1044
    %v1116 = vunpack.c.l.b16 %v1045
    %v1117 = vunpack.c.l.b16 %v1046
    %v1118 = vunpack.c.l.b16 %v1047
    %v1119 = vunpack.c.l.b16 %v1048
    %v1120 = vunpack.c.l.b16 %v1049
    %v1121 = vpack.c.b16 %v1090, %v1089
    %v1122 = vpack.c.b16 %v1092, %v1091
    %v1123 = vpack.c.b16 %v1094, %v1093
    %v1124 = vpack.c.b16 %v1096, %v1095
    %v1125 = vpack.c.b16 %v1098, %v1097
    %v1126 = vpack.c.b16 %v1100, %v1099
    %v1127 = vpack.c.b16 %v1102, %v1101
    %v1128 = vpack.c.b16 %v1104, %v1103
    %v1129 = vpack.c.b16 %v1106, %v1105
    %v1130 = vpack.c.b16 %v1108, %v1107
    %v1131 = vpack.c.b16 %v1110, %v1109
    %v1132 = vpack.c.b16 %v1112, %v1111
    %v1133 = vpack.c.b16 %v1114, %v1113
    %v1134 = vpack.c.b16 %v1116, %v1115
    %v1135 = vpack.c.b16 %v1118, %v1117
    %v1136 = vpack.c.b16 %v1120, %v1119
    %1153 = vmatprep.subr.bf16.mxu0 0
    %1154 = vmatpush1.bf16.msra.mxu0 %v1128
    %1155 = vmatprep.subr.bf16.mxu0 0
    %1156 = vmatpush1.bf16.msra.mxu0 %v1127
    %1157 = vmatprep.subr.bf16.mxu0 0
    %1158 = vmatpush1.bf16.msra.mxu0 %v1126
    %1159 = vmatprep.subr.bf16.mxu0 0
    %1160 = vmatpush1.bf16.msra.mxu0 %v1125
    %1161 = vmatprep.subr.bf16.mxu0 0
    %1162 = vmatpush1.bf16.msra.mxu0 %v1124
    %1163 = vmatprep.subr.bf16.mxu0 0
    %1164 = vmatpush1.bf16.msra.mxu0 %v1123
    %1165 = vmatprep.subr.bf16.mxu0 0
    %1166 = vmatpush1.bf16.msra.mxu0 %v1122
    %1167 = vmatprep.subr.bf16.mxu0 0
    %1168 = vmatpush1.bf16.msra.mxu0 %v1121
    %1169 = vmatprep.subr.bf16.mxu0 0
    %1170 = vmatpush2.bf16.msra.mxu0 %v1136
    %1171 = vmatprep.subr.bf16.mxu0 0
    %1172 = vmatpush2.bf16.msra.mxu0 %v1135
    %1173 = vmatprep.subr.bf16.mxu0 0
    %1174 = vmatpush2.bf16.msra.mxu0 %v1134
    %1175 = vmatprep.subr.bf16.mxu0 0
    %1176 = vmatpush2.bf16.msra.mxu0 %v1133
    %1177 = vmatprep.subr.bf16.mxu0 0
    %1178 = vmatpush2.bf16.msra.mxu0 %v1132
    %1179 = vmatprep.subr.bf16.mxu0 0
    %1180 = vmatpush2.bf16.msra.mxu0 %v1131
    %1181 = vmatprep.subr.bf16.mxu0 0
    %1182 = vmatpush2.bf16.msra.mxu0 %v1130
    %1183 = vmatprep.subr.bf16.mxu0 0
    %1184 = vmatpush2.bf16.msra.mxu0 %v1129
    %1185 = vmatprep.mubr.bf16.mxu0 %v1017
    %1186 = vmatmul.mubr.bf16.gmra.mxu0 %v1016
    %v1187 = vpop.f32.mrf.mxu0
    %v1188 = vadd.f32 %v1055, %v1187
    %v1189 = vpop.f32.mrf.mxu0
    %v1190 = vpop.f32.mrf.mxu0
    %v1191 = vpop.f32.mrf.mxu0
    %1192 = vdwg.mxu0
    %v1193 = vtanh.pop %v1188
    %v1194 = vld [vmem:[%s11] sm:$0x1]
    %v1196 = vlaneseq
    %v1197 = vshrl.u32 %v1196, 7
    %v1198 = vsub.s32 0, %v1197
    %v1199 = vrot.slane %v1194, %v1198
    %v1201 = vmul.f32 %v1193, %v1199
    %vm1202 = vcmask 25600
    %1203 = vst.msk [vmem:[#allocation8] sm:$0x3] %vm1202, %v1201
    // Predicated region
    $region62: #{tpu_custom_call.1} parent=1 // pred_check
      _
    $region63: #{tpu_custom_call.1} parent=1 // pred_check_branch
      %1205 = sbr.rel (0) target = $region65
    $region64: #{tpu_custom_call.1} parent=1 // pred_region
      %s1207 = ssub.s32 32, 32
      %1208 = vsyncadd [#allocation4], %s1207
      %s1210 = sshll.u32 [#allocation8], 4
      %s1211 = int_to_ptr.vmem [resolvable:$true] %s1210
      %1213 = dma.vmem_to_hbm [thread:$0]  %s1211, 32, %s12, [#allocation4]
    $region65: #{tpu_custom_call.1} parent=1 // pred_fallthru
      _
    // Predicated region
    $region66: #{tpu_custom_call.1} parent=1 // pred_check
      _
    $region67: #{tpu_custom_call.1} parent=1 // pred_check_branch
      %1215 = sbr.rel (0) target = $region69
    $region68: #{tpu_custom_call.1} parent=1 // pred_region
      %1216 = dma.done [#allocation4], 32
    $region69: #{tpu_custom_call.1} parent=1 // pred_fallthru
      _
    %1217 = vsyncpa [#allocation3], 1
    %1218 = vsyncpa [#allocation6], 1
    %1219 = vsyncpa [#allocation4], 1

</llo_original>
